<compile_context>
chip_gen: v7x
topology: tpu7x:2x2x1
jax: 0.10.0
libtpu: 0.0.40
codegen_flags: <defaults>
</compile_context>

<pallas_src>
import jax
import jax.numpy as jnp
from jax.experimental import pallas as pl
from jax.experimental.pallas import tpu as pltpu

# ----------------------------------------------------------------------------
# Model hyper-parameters (small, consistent with the module's forward)
# ----------------------------------------------------------------------------
NUM_CLASSES = 5          # one_hot(inputs, num_classes=5)
INPUT_DIM = NUM_CLASSES  # InputGenerator input_dim
DIM_Z = 32               # G.dim_z  (output_dim of InputGenerator / 2)
SHARED_DIM = 16          # G.shared embedding dim
IMG_C, IMG_H, IMG_W = 3, 8, 8   # synthetic generator output resolution
UPSAMPLE_SIZE = 224      # nn.UpsamplingNearest2d(size=224); folded (224 = 28*8)
CHW = IMG_C * IMG_H * IMG_W     # 192
HW = IMG_H * IMG_W              # 64
CHW_PAD = 256            # lane-dense image slab
NPAD = 128               # lane-dense logits slab


# ----------------------------------------------------------------------------
# Kernel bodies
# ----------------------------------------------------------------------------
def _generate(labels_ref, eps_ref, w_in_ref, w2_ref, w3_ref, wg_ref, bias_ref):
    """one-hot -> InputGenerator MLP -> softplus -> reparameterise -> generator."""
    tb = labels_ref.shape[0]
    b_all = bias_ref[...]                                            # (4, 512) f32
    lbl = labels_ref[...]                                            # (tb, 1) int32

    # one_hot(inputs, 5).float().squeeze(1)  -> (tb, 5)
    onehot = (jax.lax.broadcasted_iota(jnp.int32, (tb, NUM_CLASSES), 1)
              == lbl).astype(jnp.bfloat16)

    # One K=5 dot yields both the MLP pre-activation and G.shared(inputs).
    hy = jnp.dot(onehot, w_in_ref[...], preferred_element_type=jnp.float32)
    h1 = jnp.maximum(hy[:, :256] + b_all[0:1, :256], 0.0)
    y = hy[:, 256:256 + SHARED_DIM]                                  # class embedding

    h2 = jnp.maximum(
        jnp.dot(h1.astype(jnp.bfloat16), w2_ref[...],
                preferred_element_type=jnp.float32) + b_all[1:2, :512], 0.0)

    # Packed [mu | sigma_pre] head, one K=512 dot.
    ms = jnp.dot(h2.astype(jnp.bfloat16), w3_ref[...],
                 preferred_element_type=jnp.float32) + b_all[2:3, :2 * DIM_Z]
    mu = ms[:, :DIM_Z]
    sp = ms[:, DIM_Z:2 * DIM_Z]
    # softplus (stable, f32): max(x,0) + log1p(exp(-|x|))
    sigma = jnp.maximum(sp, 0.0) + jnp.log1p(jnp.exp(-jnp.abs(sp)))
    z = mu + sigma * eps_ref[...]                                    # reparameterise

    # Synthetic generator: tanh(concat([z, y]) @ [wgz ; wgy] + bg).
    # Lanes CHW..CHW_PAD of wg/bg are zero so padded columns come out tanh(0)=0.
    # TODO(synk): real BigGAN generator has no clean in-script equivalent.
    zy = jnp.concatenate([z, y], axis=-1).astype(jnp.bfloat16)       # (tb, 48)
    img = jnp.tanh(jnp.dot(zy, wg_ref[...],
                           preferred_element_type=jnp.float32)
                   + b_all[3:4, :CHW_PAD])                           # (tb, 256) f32
    return img


def _logits_kernel(labels_ref, eps_ref, w_in_ref, w2_ref, w3_ref, wg_ref,
                   bias_ref, wcb_ref, logits_ref):
    tb = labels_ref.shape[0]
    img = _generate(labels_ref, eps_ref, w_in_ref, w2_ref, w3_ref, wg_ref,
                    bias_ref)
    # Classifier head: UpsamplingNearest2d(224) + GAP == GAP on the 8x8 image
    # (224 = 28 * 8), so reduce each channel's HW lanes and apply the (3, 5)
    # linear head, all inside a lane-dense 128-wide slab.
    # TODO(synk): an external classifier that is not GAP+linear would require
    #             materializing the 224x224 upsample again.
    wcb = wcb_ref[...]                                               # (8, 128)
    logits = jnp.broadcast_to(wcb[IMG_C:IMG_C + 1, :], (tb, NPAD))   # bias row
    for c in range(IMG_C):
        m_c = jnp.mean(img[:, c * HW:(c + 1) * HW], axis=-1, keepdims=True)
        logits = logits + m_c * wcb[c:c + 1, :]
    logits_ref[...] = logits


def _image_kernel(labels_ref, eps_ref, w_in_ref, w2_ref, w3_ref, wg_ref,
                  bias_ref, img_ref):
    img_ref[...] = _generate(labels_ref, eps_ref, w_in_ref, w2_ref, w3_ref,
                             wg_ref, bias_ref)


# ----------------------------------------------------------------------------
# Full forward (matches ConditionalBigGAN.forward semantics)
# ----------------------------------------------------------------------------
def _weight_spec(shape):
    n = len(shape)
    return pl.BlockSpec(shape, lambda i, _n=n: (0,) * _n)


def conditional_biggan_forward(labels, packed, eps, image_generation=False):
    B = labels.shape[0]
    bp8 = ((B + 7) // 8) * 8                       # sublane multiple
    TB = 128 if bp8 > 128 else bp8                 # batch tile per grid step
    BP = ((bp8 + TB - 1) // TB) * TB
    nb = BP // TB

    labels_p = jnp.pad(labels, ((0, BP - B), (0, 0)))
    eps_p = jnp.pad(eps, ((0, BP - B), (0, 0)))

    weight_args = (packed["w_in"], packed["w2"], packed["w3"],
                   packed["wg"], packed["bias"])
    in_specs = [
        pl.BlockSpec((TB, 1), lambda i: (i, 0)),       # labels (batch-blocked)
        pl.BlockSpec((TB, DIM_Z), lambda i: (i, 0)),   # eps    (batch-blocked)
    ] + [_weight_spec(w.shape) for w in weight_args]   # weights stay resident

    flops = 2 * BP * (INPUT_DIM * (256 + SHARED_DIM) + 256 * 512
                      + 512 * (2 * DIM_Z) + (DIM_Z + SHARED_DIM) * CHW_PAD)
    transc = BP * (2 * DIM_Z + CHW)

    if image_generation:
        kernel = _image_kernel
        args = (labels_p, eps_p) + weight_args
        out_w = CHW_PAD
    else:
        kernel = _logits_kernel
        args = (labels_p, eps_p) + weight_args + (packed["wcb"],)
        in_specs = in_specs + [_weight_spec(packed["wcb"].shape)]
        out_w = NPAD
        flops += 2 * BP * (CHW + IMG_C * NPAD)

    bytes_accessed = int(sum(a.size * a.dtype.itemsize for a in args)
                         + BP * out_w * 4)

    out = pl.pallas_call(
        kernel,
        out_shape=jax.ShapeDtypeStruct((BP, out_w), jnp.float32),
        grid_spec=pltpu.PrefetchScalarGridSpec(
            num_scalar_prefetch=0,
            grid=(nb,),
            in_specs=in_specs,
            out_specs=pl.BlockSpec((TB, out_w), lambda i: (i, 0)),
        ),
        compiler_params=pltpu.CompilerParams(
            dimension_semantics=("parallel",)),
        cost_estimate=pl.CostEstimate(
            flops=int(flops), transcendentals=int(transc),
            bytes_accessed=bytes_accessed),
    )(*args)

    if image_generation:
        # G(z, G.shared(inputs)) returned directly (no upsample in this path).
        return out[:B, :CHW].reshape(B, IMG_C, IMG_H, IMG_W)
    return out[:B, :NUM_CLASSES]


# ----------------------------------------------------------------------------
# Deterministic parameter initialisation + one-time packing
# ----------------------------------------------------------------------------
def init_params(key):
    ks = jax.random.split(key, 10)
    scale = 0.05
    return {
        "w1":  scale * jax.random.normal(ks[0], (INPUT_DIM, 256), jnp.float32),
        "b1":  jnp.zeros((1, 256), jnp.float32),
        "w2":  scale * jax.random.normal(ks[1], (256, 512), jnp.float32),
        "b2":  jnp.zeros((1, 512), jnp.float32),
        "w3m": scale * jax.random.normal(ks[2], (512, DIM_Z), jnp.float32),
        "b3m": jnp.zeros((1, DIM_Z), jnp.float32),
        "w3s": scale * jax.random.normal(ks[3], (512, DIM_Z), jnp.float32),
        "b3s": jnp.zeros((1, DIM_Z), jnp.float32),
        "wsh": scale * jax.random.normal(ks[4], (NUM_CLASSES, SHARED_DIM), jnp.float32),
        "wgz": scale * jax.random.normal(ks[5], (DIM_Z, CHW), jnp.float32),
        "wgy": scale * jax.random.normal(ks[6], (SHARED_DIM, CHW), jnp.float32),
        "bg":  jnp.zeros((1, CHW), jnp.float32),
        "wc":  scale * jax.random.normal(ks[7], (IMG_C, NUM_CLASSES), jnp.float32),
        "bc":  jnp.zeros((1, NUM_CLASSES), jnp.float32),
    }


def pack_params(p):
    """One-time packing: concatenated weights (bf16) and bias/classifier slabs."""
    w_in = jnp.concatenate([p["w1"], p["wsh"]], axis=1).astype(jnp.bfloat16)  # (5,272)
    w2 = p["w2"].astype(jnp.bfloat16)                                          # (256,512)
    w3 = jnp.concatenate([p["w3m"], p["w3s"]], axis=1).astype(jnp.bfloat16)    # (512,64)

    wg = jnp.zeros((DIM_Z + SHARED_DIM, CHW_PAD), jnp.float32)
    wg = wg.at[:DIM_Z, :CHW].set(p["wgz"])
    wg = wg.at[DIM_Z:, :CHW].set(p["wgy"])
    wg = wg.astype(jnp.bfloat16)                                               # (48,256)

    bias = jnp.zeros((4, 512), jnp.float32)
    bias = bias.at[0, :256].set(p["b1"][0])
    bias = bias.at[1, :512].set(p["b2"][0])
    bias = bias.at[2, :DIM_Z].set(p["b3m"][0])
    bias = bias.at[2, DIM_Z:2 * DIM_Z].set(p["b3s"][0])
    bias = bias.at[3, :CHW].set(p["bg"][0])

    wcb = jnp.zeros((8, NPAD), jnp.float32)
    wcb = wcb.at[:IMG_C, :NUM_CLASSES].set(p["wc"])
    wcb = wcb.at[IMG_C, :NUM_CLASSES].set(p["bc"][0])

    return {"w_in": w_in, "w2": w2, "w3": w3, "wg": wg, "bias": bias, "wcb": wcb}


if __name__ == "__main__":
    key = jax.random.PRNGKey(0)
    k_params, k_lbl, k_eps = jax.random.split(key, 3)

    B = 2
    params = init_params(k_params)
    packed = pack_params(params)

    # inputs: integer class labels of shape (B, 1), as implied by
    # one_hot(...).squeeze(1)
    labels = jax.random.randint(k_lbl, (B, 1), 0, NUM_CLASSES, dtype=jnp.int32)
    # eps = torch.randn(*mu.shape): passed explicitly for determinism
    eps = jax.random.normal(k_eps, (B, DIM_Z), jnp.float32)

    fwd = jax.jit(conditional_biggan_forward,
                  static_argnames=("image_generation",))

    logits = jax.block_until_ready(fwd(labels, packed, eps))
    images = jax.block_until_ready(fwd(labels, packed, eps, image_generation=True))

    assert logits.shape == (B, NUM_CLASSES)
    assert images.shape == (B, IMG_C, IMG_H, IMG_W)
    assert jnp.all(jnp.isfinite(logits))
    assert jnp.all(jnp.isfinite(images))
    print("KERNEL_OK")
</pallas_src>

<mosaic_0001>
module attributes {stable_mosaic.version = 11 : i64} {
  func.func @_logits_kernel(%arg0: i32, %arg1: memref<8x1xi32, #tpu.memory_space<vmem>>, %arg2: memref<8x32xf32, #tpu.memory_space<vmem>>, %arg3: memref<5x272xbf16, #tpu.memory_space<vmem>>, %arg4: memref<256x512xbf16, #tpu.memory_space<vmem>>, %arg5: memref<512x64xbf16, #tpu.memory_space<vmem>>, %arg6: memref<48x256xbf16, #tpu.memory_space<vmem>>, %arg7: memref<4x512xf32, #tpu.memory_space<vmem>>, %arg8: memref<8x128xf32, #tpu.memory_space<vmem>>, %arg9: memref<8x128xf32, #tpu.memory_space<vmem>>) attributes {dimension_semantics = [#tpu.dimension_semantics<parallel>], iteration_bounds = array<i64: 1>, scalar_prefetch = 0 : i64, scratch_operands = 0 : i64, tpu.core_type = #tpu.core_type<tc>, window_params = [{transform_indices = @transform_0, window_bounds = array<i64: 8, 1>}, {transform_indices = @transform_1, window_bounds = array<i64: 8, 32>}, {pipeline_mode = #tpu.pipeline_mode<synchronous>, transform_indices = @transform_2, window_bounds = array<i64: 5, 272>}, {pipeline_mode = #tpu.pipeline_mode<synchronous>, transform_indices = @transform_3, window_bounds = array<i64: 256, 512>}, {pipeline_mode = #tpu.pipeline_mode<synchronous>, transform_indices = @transform_4, window_bounds = array<i64: 512, 64>}, {pipeline_mode = #tpu.pipeline_mode<synchronous>, transform_indices = @transform_5, window_bounds = array<i64: 48, 256>}, {pipeline_mode = #tpu.pipeline_mode<synchronous>, transform_indices = @transform_6, window_bounds = array<i64: 4, 512>}, {pipeline_mode = #tpu.pipeline_mode<synchronous>, transform_indices = @transform_7, window_bounds = array<i64: 8, 128>}, {transform_indices = @transform_8, window_bounds = array<i64: 8, 128>}]} {
    %c0 = arith.constant 0 : index
    %c0_0 = arith.constant 0 : index
    %0 = vector.load %arg7[%c0, %c0_0] : memref<4x512xf32, #tpu.memory_space<vmem>>, vector<4x512xf32>
    %c0_1 = arith.constant 0 : index
    %c0_2 = arith.constant 0 : index
    %1 = vector.load %arg1[%c0_1, %c0_2] : memref<8x1xi32, #tpu.memory_space<vmem>>, vector<8x1xi32>
    %2 = tpu.iota {dimensions = array<i32: 1>} : vector<8x5xi32>
    %3 = vector.broadcast %1 : vector<8x1xi32> to vector<8x5xi32>
    %4 = arith.cmpi eq, %2, %3 : vector<8x5xi32>
    %5 = arith.extui %4 : vector<8x5xi1> to vector<8x5xi32>
    %6 = arith.sitofp %5 : vector<8x5xi32> to vector<8x5xf32>
    %7 = arith.truncf %6 : vector<8x5xf32> to vector<8x5xbf16>
    %c0_3 = arith.constant 0 : index
    %c0_4 = arith.constant 0 : index
    %8 = vector.load %arg3[%c0_3, %c0_4] : memref<5x272xbf16, #tpu.memory_space<vmem>>, vector<5x272xbf16>
    %cst = arith.constant dense<0.000000e+00> : vector<8x272xf32>
    %9 = tpu.matmul %7, %8, %cst {dimension_numbers = #tpu.dot_dimension_numbers<[1], [0], [0], [1], [0, 0, 1, 1], [], []>} : vector<8x5xbf16>, vector<5x272xbf16>, vector<8x272xf32> -> vector<8x272xf32>
    %10 = vector.extract_strided_slice %9 {offsets = [0, 0], sizes = [8, 256], strides = [1, 1]} : vector<8x272xf32> to vector<8x256xf32>
    %11 = vector.extract_strided_slice %0 {offsets = [0, 0], sizes = [1, 256], strides = [1, 1]} : vector<4x512xf32> to vector<1x256xf32>
    %12 = vector.broadcast %11 : vector<1x256xf32> to vector<8x256xf32>
    %13 = arith.addf %10, %12 : vector<8x256xf32>
    %cst_5 = arith.constant 0.000000e+00 : f32
    %14 = vector.broadcast %cst_5 : f32 to vector<8x256xf32>
    %15 = arith.maximumf %13, %14 : vector<8x256xf32>
    %16 = vector.extract_strided_slice %9 {offsets = [0, 256], sizes = [8, 16], strides = [1, 1]} : vector<8x272xf32> to vector<8x16xf32>
    %17 = arith.truncf %15 : vector<8x256xf32> to vector<8x256xbf16>
    %c0_6 = arith.constant 0 : index
    %c0_7 = arith.constant 0 : index
    %18 = vector.load %arg4[%c0_6, %c0_7] : memref<256x512xbf16, #tpu.memory_space<vmem>>, vector<256x512xbf16>
    %cst_8 = arith.constant dense<0.000000e+00> : vector<8x512xf32>
    %19 = tpu.matmul %17, %18, %cst_8 {dimension_numbers = #tpu.dot_dimension_numbers<[1], [0], [0], [1], [0, 0, 1, 1], [], []>} : vector<8x256xbf16>, vector<256x512xbf16>, vector<8x512xf32> -> vector<8x512xf32>
    %20 = vector.extract_strided_slice %0 {offsets = [1, 0], sizes = [1, 512], strides = [1, 1]} : vector<4x512xf32> to vector<1x512xf32>
    %21 = vector.broadcast %20 : vector<1x512xf32> to vector<8x512xf32>
    %22 = arith.addf %19, %21 : vector<8x512xf32>
    %cst_9 = arith.constant 0.000000e+00 : f32
    %23 = vector.broadcast %cst_9 : f32 to vector<8x512xf32>
    %24 = arith.maximumf %22, %23 : vector<8x512xf32>
    %25 = arith.truncf %24 : vector<8x512xf32> to vector<8x512xbf16>
    %c0_10 = arith.constant 0 : index
    %c0_11 = arith.constant 0 : index
    %26 = vector.load %arg5[%c0_10, %c0_11] : memref<512x64xbf16, #tpu.memory_space<vmem>>, vector<512x64xbf16>
    %cst_12 = arith.constant dense<0.000000e+00> : vector<8x64xf32>
    %27 = tpu.matmul %25, %26, %cst_12 {dimension_numbers = #tpu.dot_dimension_numbers<[1], [0], [0], [1], [0, 0, 1, 1], [], []>} : vector<8x512xbf16>, vector<512x64xbf16>, vector<8x64xf32> -> vector<8x64xf32>
    %28 = vector.extract_strided_slice %0 {offsets = [2, 0], sizes = [1, 64], strides = [1, 1]} : vector<4x512xf32> to vector<1x64xf32>
    %29 = vector.broadcast %28 : vector<1x64xf32> to vector<8x64xf32>
    %30 = arith.addf %27, %29 : vector<8x64xf32>
    %31 = vector.extract_strided_slice %30 {offsets = [0, 0], sizes = [8, 32], strides = [1, 1]} : vector<8x64xf32> to vector<8x32xf32>
    %32 = vector.extract_strided_slice %30 {offsets = [0, 32], sizes = [8, 32], strides = [1, 1]} : vector<8x64xf32> to vector<8x32xf32>
    %cst_13 = arith.constant 0.000000e+00 : f32
    %33 = vector.broadcast %cst_13 : f32 to vector<8x32xf32>
    %34 = arith.maximumf %32, %33 : vector<8x32xf32>
    %35 = math.absf %32 : vector<8x32xf32>
    %cst_14 = arith.constant 0.000000e+00 : f32
    %36 = vector.broadcast %cst_14 : f32 to vector<8x32xf32>
    %37 = arith.subf %36, %35 : vector<8x32xf32>
    %38 = math.exp %37 : vector<8x32xf32>
    %39 = math.log1p %38 : vector<8x32xf32>
    %40 = arith.addf %34, %39 : vector<8x32xf32>
    %c0_15 = arith.constant 0 : index
    %c0_16 = arith.constant 0 : index
    %41 = vector.load %arg2[%c0_15, %c0_16] : memref<8x32xf32, #tpu.memory_space<vmem>>, vector<8x32xf32>
    %42 = arith.mulf %40, %41 : vector<8x32xf32>
    %43 = arith.addf %31, %42 : vector<8x32xf32>
    %44 = tpu.concatenate %43, %16 in 1 : vector<8x32xf32>, vector<8x16xf32> -> vector<8x48xf32>
    %45 = arith.truncf %44 : vector<8x48xf32> to vector<8x48xbf16>
    %c0_17 = arith.constant 0 : index
    %c0_18 = arith.constant 0 : index
    %46 = vector.load %arg6[%c0_17, %c0_18] : memref<48x256xbf16, #tpu.memory_space<vmem>>, vector<48x256xbf16>
    %cst_19 = arith.constant dense<0.000000e+00> : vector<8x256xf32>
    %47 = tpu.matmul %45, %46, %cst_19 {dimension_numbers = #tpu.dot_dimension_numbers<[1], [0], [0], [1], [0, 0, 1, 1], [], []>} : vector<8x48xbf16>, vector<48x256xbf16>, vector<8x256xf32> -> vector<8x256xf32>
    %48 = vector.extract_strided_slice %0 {offsets = [3, 0], sizes = [1, 256], strides = [1, 1]} : vector<4x512xf32> to vector<1x256xf32>
    %49 = vector.broadcast %48 : vector<1x256xf32> to vector<8x256xf32>
    %50 = arith.addf %47, %49 : vector<8x256xf32>
    %51 = math.tanh %50 : vector<8x256xf32>
    %c0_20 = arith.constant 0 : index
    %c0_21 = arith.constant 0 : index
    %52 = vector.load %arg8[%c0_20, %c0_21] : memref<8x128xf32, #tpu.memory_space<vmem>>, vector<8x128xf32>
    %53 = vector.extract_strided_slice %52 {offsets = [3, 0], sizes = [1, 128], strides = [1, 1]} : vector<8x128xf32> to vector<1x128xf32>
    %54 = vector.shape_cast %53 : vector<1x128xf32> to vector<1x128xf32>
    %55 = vector.broadcast %54 : vector<1x128xf32> to vector<8x128xf32>
    %56 = vector.extract_strided_slice %51 {offsets = [0, 0], sizes = [8, 64], strides = [1, 1]} : vector<8x256xf32> to vector<8x64xf32>
    %cst_22 = arith.constant dense<0.000000e+00> : vector<8xf32>
    %57 = vector.multi_reduction <add>, %56, %cst_22 [1] : vector<8x64xf32> to vector<8xf32>
    %58 = vector.shape_cast %57 : vector<8xf32> to vector<8x1xf32>
    %cst_23 = arith.constant 6.400000e+01 : f32
    %59 = vector.broadcast %cst_23 : f32 to vector<8x1xf32>
    %60 = arith.divf %58, %59 : vector<8x1xf32>
    %61 = vector.extract_strided_slice %52 {offsets = [0, 0], sizes = [1, 128], strides = [1, 1]} : vector<8x128xf32> to vector<1x128xf32>
    %62 = vector.broadcast %60 : vector<8x1xf32> to vector<8x128xf32>
    %63 = vector.broadcast %61 : vector<1x128xf32> to vector<8x128xf32>
    %64 = arith.mulf %62, %63 : vector<8x128xf32>
    %65 = arith.addf %55, %64 : vector<8x128xf32>
    %66 = vector.extract_strided_slice %51 {offsets = [0, 64], sizes = [8, 64], strides = [1, 1]} : vector<8x256xf32> to vector<8x64xf32>
    %cst_24 = arith.constant dense<0.000000e+00> : vector<8xf32>
    %67 = vector.multi_reduction <add>, %66, %cst_24 [1] : vector<8x64xf32> to vector<8xf32>
    %68 = vector.shape_cast %67 : vector<8xf32> to vector<8x1xf32>
    %cst_25 = arith.constant 6.400000e+01 : f32
    %69 = vector.broadcast %cst_25 : f32 to vector<8x1xf32>
    %70 = arith.divf %68, %69 : vector<8x1xf32>
    %71 = vector.extract_strided_slice %52 {offsets = [1, 0], sizes = [1, 128], strides = [1, 1]} : vector<8x128xf32> to vector<1x128xf32>
    %72 = vector.broadcast %70 : vector<8x1xf32> to vector<8x128xf32>
    %73 = vector.broadcast %71 : vector<1x128xf32> to vector<8x128xf32>
    %74 = arith.mulf %72, %73 : vector<8x128xf32>
    %75 = arith.addf %65, %74 : vector<8x128xf32>
    %76 = vector.extract_strided_slice %51 {offsets = [0, 128], sizes = [8, 64], strides = [1, 1]} : vector<8x256xf32> to vector<8x64xf32>
    %cst_26 = arith.constant dense<0.000000e+00> : vector<8xf32>
    %77 = vector.multi_reduction <add>, %76, %cst_26 [1] : vector<8x64xf32> to vector<8xf32>
    %78 = vector.shape_cast %77 : vector<8xf32> to vector<8x1xf32>
    %cst_27 = arith.constant 6.400000e+01 : f32
    %79 = vector.broadcast %cst_27 : f32 to vector<8x1xf32>
    %80 = arith.divf %78, %79 : vector<8x1xf32>
    %81 = vector.extract_strided_slice %52 {offsets = [2, 0], sizes = [1, 128], strides = [1, 1]} : vector<8x128xf32> to vector<1x128xf32>
    %82 = vector.broadcast %80 : vector<8x1xf32> to vector<8x128xf32>
    %83 = vector.broadcast %81 : vector<1x128xf32> to vector<8x128xf32>
    %84 = arith.mulf %82, %83 : vector<8x128xf32>
    %85 = arith.addf %75, %84 : vector<8x128xf32>
    %c0_28 = arith.constant 0 : index
    %c0_29 = arith.constant 0 : index
    %86 = vector.load %arg9[%c0_28, %c0_29] : memref<8x128xf32, #tpu.memory_space<vmem>>, vector<8x128xf32>
    tpu.vector_store %arg9[%c0_28, %c0_29], %85 {strides = array<i32>} : memref<8x128xf32, #tpu.memory_space<vmem>>, vector<8x128xf32>,
    return
  }
  func.func @transform_0(%arg0: i32) -> (i32, i32) {
    %c0_i32 = arith.constant 0 : i32
    %c0_i32_0 = arith.constant 0 : i32
    return %arg0, %c0_i32 : i32, i32
  }
  func.func @transform_1(%arg0: i32) -> (i32, i32) {
    %c0_i32 = arith.constant 0 : i32
    %c0_i32_0 = arith.constant 0 : i32
    return %arg0, %c0_i32 : i32, i32
  }
  func.func @transform_2(%arg0: i32) -> (i32, i32) {
    %c0_i32 = arith.constant 0 : i32
    %c0_i32_0 = arith.constant 0 : i32
    %c0_i32_1 = arith.constant 0 : i32
    return %c0_i32, %c0_i32_0 : i32, i32
  }
  func.func @transform_3(%arg0: i32) -> (i32, i32) {
    %c0_i32 = arith.constant 0 : i32
    %c0_i32_0 = arith.constant 0 : i32
    %c0_i32_1 = arith.constant 0 : i32
    return %c0_i32, %c0_i32_0 : i32, i32
  }
  func.func @transform_4(%arg0: i32) -> (i32, i32) {
    %c0_i32 = arith.constant 0 : i32
    %c0_i32_0 = arith.constant 0 : i32
    %c0_i32_1 = arith.constant 0 : i32
    return %c0_i32, %c0_i32_0 : i32, i32
  }
  func.func @transform_5(%arg0: i32) -> (i32, i32) {
    %c0_i32 = arith.constant 0 : i32
    %c0_i32_0 = arith.constant 0 : i32
    %c0_i32_1 = arith.constant 0 : i32
    return %c0_i32, %c0_i32_0 : i32, i32
  }
  func.func @transform_6(%arg0: i32) -> (i32, i32) {
    %c0_i32 = arith.constant 0 : i32
    %c0_i32_0 = arith.constant 0 : i32
    %c0_i32_1 = arith.constant 0 : i32
    return %c0_i32, %c0_i32_0 : i32, i32
  }
  func.func @transform_7(%arg0: i32) -> (i32, i32) {
    %c0_i32 = arith.constant 0 : i32
    %c0_i32_0 = arith.constant 0 : i32
    %c0_i32_1 = arith.constant 0 : i32
    return %c0_i32, %c0_i32_0 : i32, i32
  }
  func.func @transform_8(%arg0: i32) -> (i32, i32) {
    %c0_i32 = arith.constant 0 : i32
    %c0_i32_0 = arith.constant 0 : i32
    return %arg0, %c0_i32 : i32, i32
  }
}

</mosaic_0001>

<llo_original>
// kernel: conditional_biggan_forward.1
$region0: #{conditional_biggan_forward.1}
  #allocation0 [shape = 'u32[]', space=smem, size = 0x4, offset = 0x4, fixed_abs, tag = 'smem constant byte address 0x4 - core index']
  #allocation1 [shape = 'u32[144,128]{1,0:T(1,128)}', space=vmem, size = 0x12000, scoped, tag = 'internal scratch']
  %s0 = inlined_call_operand.vmem [shape: s32[8,1], index: 0, kind: input, shape index: {}]
  %s1 = inlined_call_operand.vmem [shape: f32[8,32], index: 1, kind: input, shape index: {}]
  %s2 = inlined_call_operand.vmem [shape: bf16[5,272], index: 2, kind: input, shape index: {}]
  %s3 = inlined_call_operand.hbm [shape: bf16[256,512], index: 3, kind: input, shape index: {}]
  %s4 = inlined_call_operand.vmem [shape: bf16[512,64], index: 4, kind: input, shape index: {}]
  %s5 = inlined_call_operand.vmem [shape: bf16[48,256], index: 5, kind: input, shape index: {}]
  %s6 = inlined_call_operand.vmem [shape: f32[4,512], index: 6, kind: input, shape index: {}]
  %s7 = inlined_call_operand.vmem [shape: f32[8,128], index: 7, kind: input, shape index: {}]
  %s8 = inlined_call_operand.vmem [shape: f32[8,128], index: 8, kind: output, shape index: {}]
  %s9 = sld [smem:[#allocation0]]
  $region46: #{conditional_biggan_forward.1} parent=0
    _
  %s11 = ssub.s32 1, %s9
  %s12 = scalar_select 0, %s11, %s9
  $region1: #{conditional_biggan_forward.1} parent=0
    #allocation2 [shape = 'u8[262144]{0}', space=vmem, size = 0x40000, scoped, tag = 'input window, operand 3, single buffered']
    #allocation3 [shape = 's32[1]{0}', space=sflag, size = 0x4, scoped, tag = 'scoped memory for conditional_biggan_forward.1']
    %13 = vsyncpa [#allocation3], 0
    // Predicated region
    $region2: #{conditional_biggan_forward.1} parent=1 // pred_check
      _
    $region3: #{conditional_biggan_forward.1} parent=1 // pred_check_branch
      %15 = sbr.rel (0) target = $region5
    $region4: #{conditional_biggan_forward.1} parent=1 // pred_region
      _
    $region5: #{conditional_biggan_forward.1} parent=1 // pred_fallthru
      _
    // Predicated region
    $region6: #{conditional_biggan_forward.1} parent=1 // pred_check
      _
    $region7: #{conditional_biggan_forward.1} parent=1 // pred_check_branch
      %17 = sbr.rel (0) target = $region9
    $region8: #{conditional_biggan_forward.1} parent=1 // pred_region
      _
    $region9: #{conditional_biggan_forward.1} parent=1 // pred_fallthru
      _
    // Predicated region
    $region10: #{conditional_biggan_forward.1} parent=1 // pred_check
      _
    $region11: #{conditional_biggan_forward.1} parent=1 // pred_check_branch
      %19 = sbr.rel (0) target = $region13
    $region12: #{conditional_biggan_forward.1} parent=1 // pred_region
      _
    $region13: #{conditional_biggan_forward.1} parent=1 // pred_fallthru
      _
    // Predicated region
    $region14: #{conditional_biggan_forward.1} parent=1 // pred_check
      _
    $region15: #{conditional_biggan_forward.1} parent=1 // pred_check_branch
      %21 = sbr.rel (0) target = $region17
    $region16: #{conditional_biggan_forward.1} parent=1 // pred_region
      %s23 = ssub.s32 8192, 8192
      %24 = vsyncadd [#allocation3], %s23
      %s25 = sshll.u32 [#allocation2], 4
      %s26 = int_to_ptr.vmem [resolvable:$true] %s25
      %31 = dma.hbm_to_vmem [thread:$0]  %s3, 8192, %s26, [#allocation3], 256, 256, 16
    $region17: #{conditional_biggan_forward.1} parent=1 // pred_fallthru
      _
    // Predicated region
    $region18: #{conditional_biggan_forward.1} parent=1 // pred_check
      _
    $region19: #{conditional_biggan_forward.1} parent=1 // pred_check_branch
      %33 = sbr.rel (0) target = $region21
    $region20: #{conditional_biggan_forward.1} parent=1 // pred_region
      _
    $region21: #{conditional_biggan_forward.1} parent=1 // pred_fallthru
      _
    // Predicated region
    $region22: #{conditional_biggan_forward.1} parent=1 // pred_check
      _
    $region23: #{conditional_biggan_forward.1} parent=1 // pred_check_branch
      %35 = sbr.rel (0) target = $region25
    $region24: #{conditional_biggan_forward.1} parent=1 // pred_region
      _
    $region25: #{conditional_biggan_forward.1} parent=1 // pred_fallthru
      _
    // Predicated region
    $region26: #{conditional_biggan_forward.1} parent=1 // pred_check
      _
    $region27: #{conditional_biggan_forward.1} parent=1 // pred_check_branch
      %37 = sbr.rel (0) target = $region29
    $region28: #{conditional_biggan_forward.1} parent=1 // pred_region
      _
    $region29: #{conditional_biggan_forward.1} parent=1 // pred_fallthru
      _
    // Predicated region
    $region30: #{conditional_biggan_forward.1} parent=1 // pred_check
      _
    $region31: #{conditional_biggan_forward.1} parent=1 // pred_check_branch
      %39 = sbr.rel (0) target = $region33
    $region32: #{conditional_biggan_forward.1} parent=1 // pred_region
      _
    $region33: #{conditional_biggan_forward.1} parent=1 // pred_fallthru
      _
    // Predicated region
    $region34: #{conditional_biggan_forward.1} parent=1 // pred_check
      _
    $region35: #{conditional_biggan_forward.1} parent=1 // pred_check_branch
      %41 = sbr.rel (0) target = $region37
    $region36: #{conditional_biggan_forward.1} parent=1 // pred_region
      %42 = dma.done [#allocation3], 8192
    $region37: #{conditional_biggan_forward.1} parent=1 // pred_fallthru
      _
    %v44 = vld [vmem:[%s6] sm:$0xff]
    %v45 = vld [vmem:[%s6 + $0x8] sm:$0xff]
    %v46 = vld [vmem:[%s0] sm:$0xff]
    %v47 = vlaneseq
    %v48 = vand.u32 %v47, 127
    %49 = vset.pattern.permute.xlu0 0
    %50 = vperm.xlu0 %49, %v46
    %v51 = vpop.permute.xlu0 %50
    %vm52 = vcmp.eq.s32.totalorder %v48, %v51
    %v53 = vsel %vm52, 1, 0
    %v54 = vcvt.s32.f32 %v53
    %v55 = vpack.c.bf16 %v54, %v54
    %v56 = vld [vmem:[%s2] sm:$0x77]
    %v57 = vld [vmem:[%s2 + $0x8] sm:$0x7]
    %v60 = vunpack.c.l.b16 %v56
    %v61 = vunpack.c.h.b16 %v56
    %v62 = vunpack.c.l.b16 %v57
    %v63 = vpack.c.b16 %v60, %v60
    %v64 = vpack.c.b16 %v61, %v61
    %v65 = vpack.c.b16 %v62, %v62
    %vm66 = vcmask 39936
    %v68 = vsel %vm66, %v55, 0
    %vm70 = vcmask 1041408
    %vm71 = vcmask 1042432
    %v72 = vsel %vm70, 4294967295, 65535
    %v73 = vsel %vm71, %v72, 0
    %v75 = vand.u32 %v63, %v73
    %v78 = vand.u32 %v64, %v73
    %v81 = vand.u32 %v65, %v73
    %83 = vmatprep.subr.bf16.mxu0 %v78
    %84 = vmatpush1.bf16.msra.mxu0 %v75
    %85 = vmatprep.subr.bf16.mxu0 0
    %86 = vmatpush1.bf16.msra.mxu0 0
    %87 = vmatprep.subr.bf16.mxu0 0
    %88 = vmatpush1.bf16.msra.mxu0 0
    %89 = vmatprep.subr.bf16.mxu0 0
    %90 = vmatpush1.bf16.msra.mxu0 0
    %91 = vmatprep.subr.bf16.mxu0 0
    %92 = vmatpush1.bf16.msra.mxu0 0
    %93 = vmatprep.subr.bf16.mxu0 0
    %94 = vmatpush1.bf16.msra.mxu0 0
    %95 = vmatprep.subr.bf16.mxu0 0
    %96 = vmatpush1.bf16.msra.mxu0 0
    %97 = vmatprep.subr.bf16.mxu0 0
    %98 = vmatpush1.bf16.msra.mxu0 0
    %99 = vmatprep.subr.bf16.mxu0 0
    %100 = vmatpush1.bf16.msra.mxu0 0
    %101 = vmatprep.subr.bf16.mxu0 0
    %102 = vmatpush1.bf16.msra.mxu0 0
    %103 = vmatprep.subr.bf16.mxu0 0
    %104 = vmatpush1.bf16.msra.mxu0 0
    %105 = vmatprep.subr.bf16.mxu0 0
    %106 = vmatpush1.bf16.msra.mxu0 0
    %107 = vmatprep.subr.bf16.mxu0 0
    %108 = vmatpush1.bf16.msra.mxu0 0
    %109 = vmatprep.subr.bf16.mxu0 0
    %110 = vmatpush1.bf16.msra.mxu0 0
    %111 = vmatprep.subr.bf16.mxu0 0
    %112 = vmatpush1.bf16.msra.mxu0 0
    %113 = vmatprep.subr.bf16.mxu0 0
    %114 = vmatpush1.bf16.msra.mxu0 0
    %115 = vmatprep.mubr.bf16.mxu0 0
    %116 = vmatmul.mubr.bf16.gmra.mrb[0].mxu0 %v68
    %v117 = vpop.f32.mrb[0].mxu0
    %v118 = vadd.f32 0.0, %v117
    %v119 = vpop.f32.mrb[0].mxu0
    %v120 = vadd.f32 0.0, %v119
    %v121 = vpop.f32.mrb[0].mxu0
    %v122 = vpop.f32.mrb[0].mxu0
    %123 = vdwg.mxu0
    %124 = vmatprep.subr.bf16.mxu0 0
    %125 = vmatpush1.bf16.msra.mxu0 %v81
    %126 = vmatprep.subr.bf16.mxu0 0
    %127 = vmatpush1.bf16.msra.mxu0 0
    %128 = vmatprep.subr.bf16.mxu0 0
    %129 = vmatpush1.bf16.msra.mxu0 0
    %130 = vmatprep.subr.bf16.mxu0 0
    %131 = vmatpush1.bf16.msra.mxu0 0
    %132 = vmatprep.subr.bf16.mxu0 0
    %133 = vmatpush1.bf16.msra.mxu0 0
    %134 = vmatprep.subr.bf16.mxu0 0
    %135 = vmatpush1.bf16.msra.mxu0 0
    %136 = vmatprep.subr.bf16.mxu0 0
    %137 = vmatpush1.bf16.msra.mxu0 0
    %138 = vmatprep.subr.bf16.mxu0 0
    %139 = vmatpush1.bf16.msra.mxu0 0
    %140 = vmatprep.subr.bf16.mxu0 0
    %141 = vmatpush1.bf16.msra.mxu0 0
    %142 = vmatprep.subr.bf16.mxu0 0
    %143 = vmatpush1.bf16.msra.mxu0 0
    %144 = vmatprep.subr.bf16.mxu0 0
    %145 = vmatpush1.bf16.msra.mxu0 0
    %146 = vmatprep.subr.bf16.mxu0 0
    %147 = vmatpush1.bf16.msra.mxu0 0
    %148 = vmatprep.subr.bf16.mxu0 0
    %149 = vmatpush1.bf16.msra.mxu0 0
    %150 = vmatprep.subr.bf16.mxu0 0
    %151 = vmatpush1.bf16.msra.mxu0 0
    %152 = vmatprep.subr.bf16.mxu0 0
    %153 = vmatpush1.bf16.msra.mxu0 0
    %154 = vmatprep.subr.bf16.mxu0 0
    %155 = vmatpush1.bf16.msra.mxu0 0
    %156 = vmatprep.mubr.bf16.mxu0 0
    %157 = vmatmul.mubr.bf16.gmra.mrb[0].mxu0 %v68
    %v158 = vpop.f32.mrb[0].mxu0
    %v159 = vadd.f32 0.0, %v158
    %v160 = vpop.f32.mrb[0].mxu0
    %v161 = vpop.f32.mrb[0].mxu0
    %v162 = vpop.f32.mrb[0].mxu0
    %163 = vdwg.mxu0
    %v165 = vlaneseq
    %v166 = vshrl.u32 %v165, 7
    %v167 = vsub.s32 0, %v166
    %v168 = vrot.slane %v44, %v167
    %v169 = vlaneseq
    %v170 = vshrl.u32 %v169, 7
    %v171 = vsub.s32 4, %v170
    %v172 = vrot.slane %v44, %v171
    %v175 = vlaneseq
    %v176 = vshrl.u32 %v175, 7
    %v177 = vsub.s32 0, %v176
    %v178 = vrot.slane %v168, %v177
    %v179 = vlaneseq
    %v180 = vshrl.u32 %v179, 7
    %v181 = vsub.s32 0, %v180
    %v182 = vrot.slane %v172, %v181
    %v183 = vadd.f32 %v118, %v178
    %v184 = vadd.f32 %v120, %v182
    %v185 = vmax.f32 %v183, 0.0
    %v186 = vmax.f32 %v184, 0.0
    %v187 = vpack.c.bf16 %v185, %v185
    %v188 = vpack.c.bf16 %v186, %v186
    %v189 = vld [vmem:[#allocation2] sm:$0xff]
    %v190 = vld [vmem:[#allocation2 + $0x8] sm:$0xff]
    %v191 = vld [vmem:[#allocation2 + $0x10] sm:$0xff]
    %v192 = vld [vmem:[#allocation2 + $0x18] sm:$0xff]
    %v193 = vld [vmem:[#allocation2 + $0x20] sm:$0xff]
    %v194 = vld [vmem:[#allocation2 + $0x28] sm:$0xff]
    %v195 = vld [vmem:[#allocation2 + $0x30] sm:$0xff]
    %v196 = vld [vmem:[#allocation2 + $0x38] sm:$0xff]
    %v197 = vld [vmem:[#allocation2 + $0x40] sm:$0xff]
    %v198 = vld [vmem:[#allocation2 + $0x48] sm:$0xff]
    %v199 = vld [vmem:[#allocation2 + $0x50] sm:$0xff]
    %v200 = vld [vmem:[#allocation2 + $0x58] sm:$0xff]
    %v201 = vld [vmem:[#allocation2 + $0x60] sm:$0xff]
    %v202 = vld [vmem:[#allocation2 + $0x68] sm:$0xff]
    %v203 = vld [vmem:[#allocation2 + $0x70] sm:$0xff]
    %v204 = vld [vmem:[#allocation2 + $0x78] sm:$0xff]
    %v205 = vld [vmem:[#allocation2 + $0x80] sm:$0xff]
    %v206 = vld [vmem:[#allocation2 + $0x88] sm:$0xff]
    %v207 = vld [vmem:[#allocation2 + $0x90] sm:$0xff]
    %v208 = vld [vmem:[#allocation2 + $0x98] sm:$0xff]
    %v209 = vld [vmem:[#allocation2 + $0xa0] sm:$0xff]
    %v210 = vld [vmem:[#allocation2 + $0xa8] sm:$0xff]
    %v211 = vld [vmem:[#allocation2 + $0xb0] sm:$0xff]
    %v212 = vld [vmem:[#allocation2 + $0xb8] sm:$0xff]
    %v213 = vld [vmem:[#allocation2 + $0xc0] sm:$0xff]
    %v214 = vld [vmem:[#allocation2 + $0xc8] sm:$0xff]
    %v215 = vld [vmem:[#allocation2 + $0xd0] sm:$0xff]
    %v216 = vld [vmem:[#allocation2 + $0xd8] sm:$0xff]
    %v217 = vld [vmem:[#allocation2 + $0xe0] sm:$0xff]
    %v218 = vld [vmem:[#allocation2 + $0xe8] sm:$0xff]
    %v219 = vld [vmem:[#allocation2 + $0xf0] sm:$0xff]
    %v220 = vld [vmem:[#allocation2 + $0xf8] sm:$0xff]
    %v221 = vld [vmem:[#allocation2 + $0x100] sm:$0xff]
    %v222 = vld [vmem:[#allocation2 + $0x108] sm:$0xff]
    %v223 = vld [vmem:[#allocation2 + $0x110] sm:$0xff]
    %v224 = vld [vmem:[#allocation2 + $0x118] sm:$0xff]
    %v225 = vld [vmem:[#allocation2 + $0x120] sm:$0xff]
    %v226 = vld [vmem:[#allocation2 + $0x128] sm:$0xff]
    %v227 = vld [vmem:[#allocation2 + $0x130] sm:$0xff]
    %v228 = vld [vmem:[#allocation2 + $0x138] sm:$0xff]
    %v229 = vld [vmem:[#allocation2 + $0x140] sm:$0xff]
    %v230 = vld [vmem:[#allocation2 + $0x148] sm:$0xff]
    %v231 = vld [vmem:[#allocation2 + $0x150] sm:$0xff]
    %v232 = vld [vmem:[#allocation2 + $0x158] sm:$0xff]
    %v233 = vld [vmem:[#allocation2 + $0x160] sm:$0xff]
    %v234 = vld [vmem:[#allocation2 + $0x168] sm:$0xff]
    %v235 = vld [vmem:[#allocation2 + $0x170] sm:$0xff]
    %v236 = vld [vmem:[#allocation2 + $0x178] sm:$0xff]
    %v237 = vld [vmem:[#allocation2 + $0x180] sm:$0xff]
    %v238 = vld [vmem:[#allocation2 + $0x188] sm:$0xff]
    %v239 = vld [vmem:[#allocation2 + $0x190] sm:$0xff]
    %v240 = vld [vmem:[#allocation2 + $0x198] sm:$0xff]
    %v241 = vld [vmem:[#allocation2 + $0x1a0] sm:$0xff]
    %v242 = vld [vmem:[#allocation2 + $0x1a8] sm:$0xff]
    %v243 = vld [vmem:[#allocation2 + $0x1b0] sm:$0xff]
    %v244 = vld [vmem:[#allocation2 + $0x1b8] sm:$0xff]
    %v245 = vld [vmem:[#allocation2 + $0x1c0] sm:$0xff]
    %v246 = vld [vmem:[#allocation2 + $0x1c8] sm:$0xff]
    %v247 = vld [vmem:[#allocation2 + $0x1d0] sm:$0xff]
    %v248 = vld [vmem:[#allocation2 + $0x1d8] sm:$0xff]
    %v249 = vld [vmem:[#allocation2 + $0x1e0] sm:$0xff]
    %v250 = vld [vmem:[#allocation2 + $0x1e8] sm:$0xff]
    %v251 = vld [vmem:[#allocation2 + $0x1f0] sm:$0xff]
    %v252 = vld [vmem:[#allocation2 + $0x1f8] sm:$0xff]
    %v254 = vlaneseq
    %v255 = vshrl.u32 %v254, 7
    %v256 = vsub.s32 1, %v255
    %v257 = vrot.slane %v44, %v256
    %v258 = vlaneseq
    %v259 = vshrl.u32 %v258, 7
    %v260 = vsub.s32 5, %v259
    %v261 = vrot.slane %v44, %v260
    %v262 = vlaneseq
    %v263 = vshrl.u32 %v262, 7
    %v264 = vsub.s32 1, %v263
    %v265 = vrot.slane %v45, %v264
    %v266 = vlaneseq
    %v267 = vshrl.u32 %v266, 7
    %v268 = vsub.s32 5, %v267
    %v269 = vrot.slane %v45, %v268
    %v274 = vlaneseq
    %v275 = vshrl.u32 %v274, 7
    %v276 = vsub.s32 1, %v275
    %v277 = vrot.slane %v257, %v276
    %v278 = vlaneseq
    %v279 = vshrl.u32 %v278, 7
    %v280 = vsub.s32 1, %v279
    %v281 = vrot.slane %v261, %v280
    %v282 = vlaneseq
    %v283 = vshrl.u32 %v282, 7
    %v284 = vsub.s32 1, %v283
    %v285 = vrot.slane %v265, %v284
    %v286 = vlaneseq
    %v287 = vshrl.u32 %v286, 7
    %v288 = vsub.s32 1, %v287
    %v289 = vrot.slane %v269, %v288
    %v354 = vunpack.c.l.b16 %v189
    %v355 = vunpack.c.h.b16 %v189
    %v356 = vunpack.c.l.b16 %v190
    %v357 = vunpack.c.h.b16 %v190
    %v358 = vunpack.c.l.b16 %v191
    %v359 = vunpack.c.h.b16 %v191
    %v360 = vunpack.c.l.b16 %v192
    %v361 = vunpack.c.h.b16 %v192
    %v362 = vunpack.c.l.b16 %v193
    %v363 = vunpack.c.h.b16 %v193
    %v364 = vunpack.c.l.b16 %v194
    %v365 = vunpack.c.h.b16 %v194
    %v366 = vunpack.c.l.b16 %v195
    %v367 = vunpack.c.h.b16 %v195
    %v368 = vunpack.c.l.b16 %v196
    %v369 = vunpack.c.h.b16 %v196
    %v370 = vunpack.c.l.b16 %v197
    %v371 = vunpack.c.h.b16 %v197
    %v372 = vunpack.c.l.b16 %v198
    %v373 = vunpack.c.h.b16 %v198
    %v374 = vunpack.c.l.b16 %v199
    %v375 = vunpack.c.h.b16 %v199
    %v376 = vunpack.c.l.b16 %v200
    %v377 = vunpack.c.h.b16 %v200
    %v378 = vunpack.c.l.b16 %v201
    %v379 = vunpack.c.h.b16 %v201
    %v380 = vunpack.c.l.b16 %v202
    %v381 = vunpack.c.h.b16 %v202
    %v382 = vunpack.c.l.b16 %v203
    %v383 = vunpack.c.h.b16 %v203
    %v384 = vunpack.c.l.b16 %v204
    %v385 = vunpack.c.h.b16 %v204
    %v386 = vunpack.c.l.b16 %v205
    %v387 = vunpack.c.h.b16 %v205
    %v388 = vunpack.c.l.b16 %v206
    %v389 = vunpack.c.h.b16 %v206
    %v390 = vunpack.c.l.b16 %v207
    %v391 = vunpack.c.h.b16 %v207
    %v392 = vunpack.c.l.b16 %v208
    %v393 = vunpack.c.h.b16 %v208
    %v394 = vunpack.c.l.b16 %v209
    %v395 = vunpack.c.h.b16 %v209
    %v396 = vunpack.c.l.b16 %v210
    %v397 = vunpack.c.h.b16 %v210
    %v398 = vunpack.c.l.b16 %v211
    %v399 = vunpack.c.h.b16 %v211
    %v400 = vunpack.c.l.b16 %v212
    %v401 = vunpack.c.h.b16 %v212
    %v402 = vunpack.c.l.b16 %v213
    %v403 = vunpack.c.h.b16 %v213
    %v404 = vunpack.c.l.b16 %v214
    %v405 = vunpack.c.h.b16 %v214
    %v406 = vunpack.c.l.b16 %v215
    %v407 = vunpack.c.h.b16 %v215
    %v408 = vunpack.c.l.b16 %v216
    %v409 = vunpack.c.h.b16 %v216
    %v410 = vunpack.c.l.b16 %v217
    %v411 = vunpack.c.h.b16 %v217
    %v412 = vunpack.c.l.b16 %v218
    %v413 = vunpack.c.h.b16 %v218
    %v414 = vunpack.c.l.b16 %v219
    %v415 = vunpack.c.h.b16 %v219
    %v416 = vunpack.c.l.b16 %v220
    %v417 = vunpack.c.h.b16 %v220
    %v418 = vunpack.c.l.b16 %v221
    %v419 = vunpack.c.h.b16 %v221
    %v420 = vunpack.c.l.b16 %v222
    %v421 = vunpack.c.h.b16 %v222
    %v422 = vunpack.c.l.b16 %v223
    %v423 = vunpack.c.h.b16 %v223
    %v424 = vunpack.c.l.b16 %v224
    %v425 = vunpack.c.h.b16 %v224
    %v426 = vunpack.c.l.b16 %v225
    %v427 = vunpack.c.h.b16 %v225
    %v428 = vunpack.c.l.b16 %v226
    %v429 = vunpack.c.h.b16 %v226
    %v430 = vunpack.c.l.b16 %v227
    %v431 = vunpack.c.h.b16 %v227
    %v432 = vunpack.c.l.b16 %v228
    %v433 = vunpack.c.h.b16 %v228
    %v434 = vunpack.c.l.b16 %v229
    %v435 = vunpack.c.h.b16 %v229
    %v436 = vunpack.c.l.b16 %v230
    %v437 = vunpack.c.h.b16 %v230
    %v438 = vunpack.c.l.b16 %v231
    %v439 = vunpack.c.h.b16 %v231
    %v440 = vunpack.c.l.b16 %v232
    %v441 = vunpack.c.h.b16 %v232
    %v442 = vunpack.c.l.b16 %v233
    %v443 = vunpack.c.h.b16 %v233
    %v444 = vunpack.c.l.b16 %v234
    %v445 = vunpack.c.h.b16 %v234
    %v446 = vunpack.c.l.b16 %v235
    %v447 = vunpack.c.h.b16 %v235
    %v448 = vunpack.c.l.b16 %v236
    %v449 = vunpack.c.h.b16 %v236
    %v450 = vunpack.c.l.b16 %v237
    %v451 = vunpack.c.h.b16 %v237
    %v452 = vunpack.c.l.b16 %v238
    %v453 = vunpack.c.h.b16 %v238
    %v454 = vunpack.c.l.b16 %v239
    %v455 = vunpack.c.h.b16 %v239
    %v456 = vunpack.c.l.b16 %v240
    %v457 = vunpack.c.h.b16 %v240
    %v458 = vunpack.c.l.b16 %v241
    %v459 = vunpack.c.h.b16 %v241
    %v460 = vunpack.c.l.b16 %v242
    %v461 = vunpack.c.h.b16 %v242
    %v462 = vunpack.c.l.b16 %v243
    %v463 = vunpack.c.h.b16 %v243
    %v464 = vunpack.c.l.b16 %v244
    %v465 = vunpack.c.h.b16 %v244
    %v466 = vunpack.c.l.b16 %v245
    %v467 = vunpack.c.h.b16 %v245
    %v468 = vunpack.c.l.b16 %v246
    %v469 = vunpack.c.h.b16 %v246
    %v470 = vunpack.c.l.b16 %v247
    %v471 = vunpack.c.h.b16 %v247
    %v472 = vunpack.c.l.b16 %v248
    %v473 = vunpack.c.h.b16 %v248
    %v474 = vunpack.c.l.b16 %v249
    %v475 = vunpack.c.h.b16 %v249
    %v476 = vunpack.c.l.b16 %v250
    %v477 = vunpack.c.h.b16 %v250
    %v478 = vunpack.c.l.b16 %v251
    %v479 = vunpack.c.h.b16 %v251
    %v480 = vunpack.c.l.b16 %v252
    %v481 = vunpack.c.h.b16 %v252
    %v482 = vpack.c.b16 %v358, %v354
    %v483 = vpack.c.b16 %v359, %v355
    %v484 = vpack.c.b16 %v360, %v356
    %v485 = vpack.c.b16 %v361, %v357
    %v486 = vpack.c.b16 %v366, %v362
    %v487 = vpack.c.b16 %v367, %v363
    %v488 = vpack.c.b16 %v368, %v364
    %v489 = vpack.c.b16 %v369, %v365
    %v490 = vpack.c.b16 %v374, %v370
    %v491 = vpack.c.b16 %v375, %v371
    %v492 = vpack.c.b16 %v376, %v372
    %v493 = vpack.c.b16 %v377, %v373
    %v494 = vpack.c.b16 %v382, %v378
    %v495 = vpack.c.b16 %v383, %v379
    %v496 = vpack.c.b16 %v384, %v380
    %v497 = vpack.c.b16 %v385, %v381
    %v498 = vpack.c.b16 %v390, %v386
    %v499 = vpack.c.b16 %v391, %v387
    %v500 = vpack.c.b16 %v392, %v388
    %v501 = vpack.c.b16 %v393, %v389
    %v502 = vpack.c.b16 %v398, %v394
    %v503 = vpack.c.b16 %v399, %v395
    %v504 = vpack.c.b16 %v400, %v396
    %v505 = vpack.c.b16 %v401, %v397
    %v506 = vpack.c.b16 %v406, %v402
    %v507 = vpack.c.b16 %v407, %v403
    %v508 = vpack.c.b16 %v408, %v404
    %v509 = vpack.c.b16 %v409, %v405
    %v510 = vpack.c.b16 %v414, %v410
    %v511 = vpack.c.b16 %v415, %v411
    %v512 = vpack.c.b16 %v416, %v412
    %v513 = vpack.c.b16 %v417, %v413
    %v514 = vpack.c.b16 %v422, %v418
    %v515 = vpack.c.b16 %v423, %v419
    %v516 = vpack.c.b16 %v424, %v420
    %v517 = vpack.c.b16 %v425, %v421
    %v518 = vpack.c.b16 %v430, %v426
    %v519 = vpack.c.b16 %v431, %v427
    %v520 = vpack.c.b16 %v432, %v428
    %v521 = vpack.c.b16 %v433, %v429
    %v522 = vpack.c.b16 %v438, %v434
    %v523 = vpack.c.b16 %v439, %v435
    %v524 = vpack.c.b16 %v440, %v436
    %v525 = vpack.c.b16 %v441, %v437
    %v526 = vpack.c.b16 %v446, %v442
    %v527 = vpack.c.b16 %v447, %v443
    %v528 = vpack.c.b16 %v448, %v444
    %v529 = vpack.c.b16 %v449, %v445
    %v530 = vpack.c.b16 %v454, %v450
    %v531 = vpack.c.b16 %v455, %v451
    %v532 = vpack.c.b16 %v456, %v452
    %v533 = vpack.c.b16 %v457, %v453
    %v534 = vpack.c.b16 %v462, %v458
    %v535 = vpack.c.b16 %v463, %v459
    %v536 = vpack.c.b16 %v464, %v460
    %v537 = vpack.c.b16 %v465, %v461
    %v538 = vpack.c.b16 %v470, %v466
    %v539 = vpack.c.b16 %v471, %v467
    %v540 = vpack.c.b16 %v472, %v468
    %v541 = vpack.c.b16 %v473, %v469
    %v542 = vpack.c.b16 %v478, %v474
    %v543 = vpack.c.b16 %v479, %v475
    %v544 = vpack.c.b16 %v480, %v476
    %v545 = vpack.c.b16 %v481, %v477
    %610 = vmatprep.subr.bf16.mxu0 %v483
    %611 = vmatpush1.bf16.msra.mxu0 %v482
    %612 = vmatprep.subr.bf16.mxu0 %v487
    %613 = vmatpush1.bf16.msra.mxu0 %v486
    %614 = vmatprep.subr.bf16.mxu0 %v491
    %615 = vmatpush1.bf16.msra.mxu0 %v490
    %616 = vmatprep.subr.bf16.mxu0 %v495
    %617 = vmatpush1.bf16.msra.mxu0 %v494
    %618 = vmatprep.subr.bf16.mxu0 %v499
    %619 = vmatpush1.bf16.msra.mxu0 %v498
    %620 = vmatprep.subr.bf16.mxu0 %v503
    %621 = vmatpush1.bf16.msra.mxu0 %v502
    %622 = vmatprep.subr.bf16.mxu0 %v507
    %623 = vmatpush1.bf16.msra.mxu0 %v506
    %624 = vmatprep.subr.bf16.mxu0 %v511
    %625 = vmatpush1.bf16.msra.mxu0 %v510
    %626 = vmatprep.subr.bf16.mxu0 %v515
    %627 = vmatpush1.bf16.msra.mxu0 %v514
    %628 = vmatprep.subr.bf16.mxu0 %v519
    %629 = vmatpush1.bf16.msra.mxu0 %v518
    %630 = vmatprep.subr.bf16.mxu0 %v523
    %631 = vmatpush1.bf16.msra.mxu0 %v522
    %632 = vmatprep.subr.bf16.mxu0 %v527
    %633 = vmatpush1.bf16.msra.mxu0 %v526
    %634 = vmatprep.subr.bf16.mxu0 %v531
    %635 = vmatpush1.bf16.msra.mxu0 %v530
    %636 = vmatprep.subr.bf16.mxu0 %v535
    %637 = vmatpush1.bf16.msra.mxu0 %v534
    %638 = vmatprep.subr.bf16.mxu0 %v539
    %639 = vmatpush1.bf16.msra.mxu0 %v538
    %640 = vmatprep.subr.bf16.mxu0 %v543
    %641 = vmatpush1.bf16.msra.mxu0 %v542
    %642 = vmatprep.mubr.bf16.mxu0 %v188
    %643 = vmatmul.mubr.bf16.gmra.mrb[0].mxu0 %v187
    %v644 = vpop.f32.mrb[0].mxu0
    %v645 = vadd.f32 %v277, %v644
    %v646 = vpop.f32.mrb[0].mxu0
    %v647 = vadd.f32 %v281, %v646
    %v648 = vpop.f32.mrb[0].mxu0
    %v649 = vpop.f32.mrb[0].mxu0
    %650 = vdwg.mxu0
    %651 = vmatprep.subr.bf16.mxu0 %v485
    %652 = vmatpush1.bf16.msra.mxu0 %v484
    %653 = vmatprep.subr.bf16.mxu0 %v489
    %654 = vmatpush1.bf16.msra.mxu0 %v488
    %655 = vmatprep.subr.bf16.mxu0 %v493
    %656 = vmatpush1.bf16.msra.mxu0 %v492
    %657 = vmatprep.subr.bf16.mxu0 %v497
    %658 = vmatpush1.bf16.msra.mxu0 %v496
    %659 = vmatprep.subr.bf16.mxu0 %v501
    %660 = vmatpush1.bf16.msra.mxu0 %v500
    %661 = vmatprep.subr.bf16.mxu0 %v505
    %662 = vmatpush1.bf16.msra.mxu0 %v504
    %663 = vmatprep.subr.bf16.mxu0 %v509
    %664 = vmatpush1.bf16.msra.mxu0 %v508
    %665 = vmatprep.subr.bf16.mxu0 %v513
    %666 = vmatpush1.bf16.msra.mxu0 %v512
    %667 = vmatprep.subr.bf16.mxu0 %v517
    %668 = vmatpush1.bf16.msra.mxu0 %v516
    %669 = vmatprep.subr.bf16.mxu0 %v521
    %670 = vmatpush1.bf16.msra.mxu0 %v520
    %671 = vmatprep.subr.bf16.mxu0 %v525
    %672 = vmatpush1.bf16.msra.mxu0 %v524
    %673 = vmatprep.subr.bf16.mxu0 %v529
    %674 = vmatpush1.bf16.msra.mxu0 %v528
    %675 = vmatprep.subr.bf16.mxu0 %v533
    %676 = vmatpush1.bf16.msra.mxu0 %v532
    %677 = vmatprep.subr.bf16.mxu0 %v537
    %678 = vmatpush1.bf16.msra.mxu0 %v536
    %679 = vmatprep.subr.bf16.mxu0 %v541
    %680 = vmatpush1.bf16.msra.mxu0 %v540
    %681 = vmatprep.subr.bf16.mxu0 %v545
    %682 = vmatpush1.bf16.msra.mxu0 %v544
    %683 = vmatprep.mubr.bf16.mxu0 %v188
    %684 = vmatmul.mubr.bf16.gmra.mrb[0].mxu0 %v187
    %v685 = vpop.f32.mrb[0].mxu0
    %v686 = vadd.f32 %v285, %v685
    %v687 = vpop.f32.mrb[0].mxu0
    %v688 = vadd.f32 %v289, %v687
    %v689 = vpop.f32.mrb[0].mxu0
    %v690 = vpop.f32.mrb[0].mxu0
    %691 = vdwg.mxu0
    %v692 = vmax.f32 %v645, 0.0
    %v693 = vmax.f32 %v647, 0.0
    %v694 = vmax.f32 %v686, 0.0
    %v695 = vmax.f32 %v688, 0.0
    %v696 = vpack.c.bf16 %v692, %v692
    %v697 = vpack.c.bf16 %v693, %v693
    %v698 = vpack.c.bf16 %v694, %v694
    %v699 = vpack.c.bf16 %v695, %v695
    %v700 = vld [vmem:[%s4] sm:$0xf]
    %v701 = vld [vmem:[%s4 + $0x4] sm:$0xf]
    %v702 = vld [vmem:[%s4 + $0x8] sm:$0xf]
    %v703 = vld [vmem:[%s4 + $0xc] sm:$0xf]
    %v704 = vld [vmem:[%s4 + $0x10] sm:$0xf]
    %v705 = vld [vmem:[%s4 + $0x14] sm:$0xf]
    %v706 = vld [vmem:[%s4 + $0x18] sm:$0xf]
    %v707 = vld [vmem:[%s4 + $0x1c] sm:$0xf]
    %v708 = vld [vmem:[%s4 + $0x20] sm:$0xf]
    %v709 = vld [vmem:[%s4 + $0x24] sm:$0xf]
    %v710 = vld [vmem:[%s4 + $0x28] sm:$0xf]
    %v711 = vld [vmem:[%s4 + $0x2c] sm:$0xf]
    %v712 = vld [vmem:[%s4 + $0x30] sm:$0xf]
    %v713 = vld [vmem:[%s4 + $0x34] sm:$0xf]
    %v714 = vld [vmem:[%s4 + $0x38] sm:$0xf]
    %v715 = vld [vmem:[%s4 + $0x3c] sm:$0xf]
    %v716 = vld [vmem:[%s4 + $0x40] sm:$0xf]
    %v717 = vld [vmem:[%s4 + $0x44] sm:$0xf]
    %v718 = vld [vmem:[%s4 + $0x48] sm:$0xf]
    %v719 = vld [vmem:[%s4 + $0x4c] sm:$0xf]
    %v720 = vld [vmem:[%s4 + $0x50] sm:$0xf]
    %v721 = vld [vmem:[%s4 + $0x54] sm:$0xf]
    %v722 = vld [vmem:[%s4 + $0x58] sm:$0xf]
    %v723 = vld [vmem:[%s4 + $0x5c] sm:$0xf]
    %v724 = vld [vmem:[%s4 + $0x60] sm:$0xf]
    %v725 = vld [vmem:[%s4 + $0x64] sm:$0xf]
    %v726 = vld [vmem:[%s4 + $0x68] sm:$0xf]
    %v727 = vld [vmem:[%s4 + $0x6c] sm:$0xf]
    %v728 = vld [vmem:[%s4 + $0x70] sm:$0xf]
    %v729 = vld [vmem:[%s4 + $0x74] sm:$0xf]
    %v730 = vld [vmem:[%s4 + $0x78] sm:$0xf]
    %v731 = vld [vmem:[%s4 + $0x7c] sm:$0xf]
    %v732 = vld [vmem:[%s4 + $0x80] sm:$0xf]
    %v733 = vld [vmem:[%s4 + $0x84] sm:$0xf]
    %v734 = vld [vmem:[%s4 + $0x88] sm:$0xf]
    %v735 = vld [vmem:[%s4 + $0x8c] sm:$0xf]
    %v736 = vld [vmem:[%s4 + $0x90] sm:$0xf]
    %v737 = vld [vmem:[%s4 + $0x94] sm:$0xf]
    %v738 = vld [vmem:[%s4 + $0x98] sm:$0xf]
    %v739 = vld [vmem:[%s4 + $0x9c] sm:$0xf]
    %v740 = vld [vmem:[%s4 + $0xa0] sm:$0xf]
    %v741 = vld [vmem:[%s4 + $0xa4] sm:$0xf]
    %v742 = vld [vmem:[%s4 + $0xa8] sm:$0xf]
    %v743 = vld [vmem:[%s4 + $0xac] sm:$0xf]
    %v744 = vld [vmem:[%s4 + $0xb0] sm:$0xf]
    %v745 = vld [vmem:[%s4 + $0xb4] sm:$0xf]
    %v746 = vld [vmem:[%s4 + $0xb8] sm:$0xf]
    %v747 = vld [vmem:[%s4 + $0xbc] sm:$0xf]
    %v748 = vld [vmem:[%s4 + $0xc0] sm:$0xf]
    %v749 = vld [vmem:[%s4 + $0xc4] sm:$0xf]
    %v750 = vld [vmem:[%s4 + $0xc8] sm:$0xf]
    %v751 = vld [vmem:[%s4 + $0xcc] sm:$0xf]
    %v752 = vld [vmem:[%s4 + $0xd0] sm:$0xf]
    %v753 = vld [vmem:[%s4 + $0xd4] sm:$0xf]
    %v754 = vld [vmem:[%s4 + $0xd8] sm:$0xf]
    %v755 = vld [vmem:[%s4 + $0xdc] sm:$0xf]
    %v756 = vld [vmem:[%s4 + $0xe0] sm:$0xf]
    %v757 = vld [vmem:[%s4 + $0xe4] sm:$0xf]
    %v758 = vld [vmem:[%s4 + $0xe8] sm:$0xf]
    %v759 = vld [vmem:[%s4 + $0xec] sm:$0xf]
    %v760 = vld [vmem:[%s4 + $0xf0] sm:$0xf]
    %v761 = vld [vmem:[%s4 + $0xf4] sm:$0xf]
    %v762 = vld [vmem:[%s4 + $0xf8] sm:$0xf]
    %v763 = vld [vmem:[%s4 + $0xfc] sm:$0xf]
    %v764 = vlaneseq
    %v765 = vshrl.u32 %v764, 7
    %v766 = vsub.s32 2, %v765
    %v767 = vrot.slane %v44, %v766
    %v832 = vunpack.c.l.b16 %v700
    %v833 = vunpack.c.l.b16 %v701
    %v834 = vunpack.c.l.b16 %v702
    %v835 = vunpack.c.l.b16 %v703
    %v836 = vunpack.c.l.b16 %v704
    %v837 = vunpack.c.l.b16 %v705
    %v838 = vunpack.c.l.b16 %v706
    %v839 = vunpack.c.l.b16 %v707
    %v840 = vunpack.c.l.b16 %v708
    %v841 = vunpack.c.l.b16 %v709
    %v842 = vunpack.c.l.b16 %v710
    %v843 = vunpack.c.l.b16 %v711
    %v844 = vunpack.c.l.b16 %v712
    %v845 = vunpack.c.l.b16 %v713
    %v846 = vunpack.c.l.b16 %v714
    %v847 = vunpack.c.l.b16 %v715
    %v848 = vunpack.c.l.b16 %v716
    %v849 = vunpack.c.l.b16 %v717
    %v850 = vunpack.c.l.b16 %v718
    %v851 = vunpack.c.l.b16 %v719
    %v852 = vunpack.c.l.b16 %v720
    %v853 = vunpack.c.l.b16 %v721
    %v854 = vunpack.c.l.b16 %v722
    %v855 = vunpack.c.l.b16 %v723
    %v856 = vunpack.c.l.b16 %v724
    %v857 = vunpack.c.l.b16 %v725
    %v858 = vunpack.c.l.b16 %v726
    %v859 = vunpack.c.l.b16 %v727
    %v860 = vunpack.c.l.b16 %v728
    %v861 = vunpack.c.l.b16 %v729
    %v862 = vunpack.c.l.b16 %v730
    %v863 = vunpack.c.l.b16 %v731
    %v864 = vunpack.c.l.b16 %v732
    %v865 = vunpack.c.l.b16 %v733
    %v866 = vunpack.c.l.b16 %v734
    %v867 = vunpack.c.l.b16 %v735
    %v868 = vunpack.c.l.b16 %v736
    %v869 = vunpack.c.l.b16 %v737
    %v870 = vunpack.c.l.b16 %v738
    %v871 = vunpack.c.l.b16 %v739
    %v872 = vunpack.c.l.b16 %v740
    %v873 = vunpack.c.l.b16 %v741
    %v874 = vunpack.c.l.b16 %v742
    %v875 = vunpack.c.l.b16 %v743
    %v876 = vunpack.c.l.b16 %v744
    %v877 = vunpack.c.l.b16 %v745
    %v878 = vunpack.c.l.b16 %v746
    %v879 = vunpack.c.l.b16 %v747
    %v880 = vunpack.c.l.b16 %v748
    %v881 = vunpack.c.l.b16 %v749
    %v882 = vunpack.c.l.b16 %v750
    %v883 = vunpack.c.l.b16 %v751
    %v884 = vunpack.c.l.b16 %v752
    %v885 = vunpack.c.l.b16 %v753
    %v886 = vunpack.c.l.b16 %v754
    %v887 = vunpack.c.l.b16 %v755
    %v888 = vunpack.c.l.b16 %v756
    %v889 = vunpack.c.l.b16 %v757
    %v890 = vunpack.c.l.b16 %v758
    %v891 = vunpack.c.l.b16 %v759
    %v892 = vunpack.c.l.b16 %v760
    %v893 = vunpack.c.l.b16 %v761
    %v894 = vunpack.c.l.b16 %v762
    %v895 = vunpack.c.l.b16 %v763
    %v896 = vpack.c.b16 %v833, %v832
    %v897 = vpack.c.b16 %v835, %v834
    %v898 = vpack.c.b16 %v837, %v836
    %v899 = vpack.c.b16 %v839, %v838
    %v900 = vpack.c.b16 %v841, %v840
    %v901 = vpack.c.b16 %v843, %v842
    %v902 = vpack.c.b16 %v845, %v844
    %v903 = vpack.c.b16 %v847, %v846
    %v904 = vpack.c.b16 %v849, %v848
    %v905 = vpack.c.b16 %v851, %v850
    %v906 = vpack.c.b16 %v853, %v852
    %v907 = vpack.c.b16 %v855, %v854
    %v908 = vpack.c.b16 %v857, %v856
    %v909 = vpack.c.b16 %v859, %v858
    %v910 = vpack.c.b16 %v861, %v860
    %v911 = vpack.c.b16 %v863, %v862
    %v912 = vpack.c.b16 %v865, %v864
    %v913 = vpack.c.b16 %v867, %v866
    %v914 = vpack.c.b16 %v869, %v868
    %v915 = vpack.c.b16 %v871, %v870
    %v916 = vpack.c.b16 %v873, %v872
    %v917 = vpack.c.b16 %v875, %v874
    %v918 = vpack.c.b16 %v877, %v876
    %v919 = vpack.c.b16 %v879, %v878
    %v920 = vpack.c.b16 %v881, %v880
    %v921 = vpack.c.b16 %v883, %v882
    %v922 = vpack.c.b16 %v885, %v884
    %v923 = vpack.c.b16 %v887, %v886
    %v924 = vpack.c.b16 %v889, %v888
    %v925 = vpack.c.b16 %v891, %v890
    %v926 = vpack.c.b16 %v893, %v892
    %v927 = vpack.c.b16 %v895, %v894
    %960 = vmatprep.subr.bf16.mxu0 0
    %961 = vmatpush1.bf16.msra.mxu0 %v896
    %962 = vmatprep.subr.bf16.mxu0 0
    %963 = vmatpush1.bf16.msra.mxu0 %v897
    %964 = vmatprep.subr.bf16.mxu0 0
    %965 = vmatpush1.bf16.msra.mxu0 %v898
    %966 = vmatprep.subr.bf16.mxu0 0
    %967 = vmatpush1.bf16.msra.mxu0 %v899
    %968 = vmatprep.subr.bf16.mxu0 0
    %969 = vmatpush1.bf16.msra.mxu0 %v900
    %970 = vmatprep.subr.bf16.mxu0 0
    %971 = vmatpush1.bf16.msra.mxu0 %v901
    %972 = vmatprep.subr.bf16.mxu0 0
    %973 = vmatpush1.bf16.msra.mxu0 %v902
    %974 = vmatprep.subr.bf16.mxu0 0
    %975 = vmatpush1.bf16.msra.mxu0 %v903
    %976 = vmatprep.subr.bf16.mxu0 0
    %977 = vmatpush1.bf16.msra.mxu0 %v904
    %978 = vmatprep.subr.bf16.mxu0 0
    %979 = vmatpush1.bf16.msra.mxu0 %v905
    %980 = vmatprep.subr.bf16.mxu0 0
    %981 = vmatpush1.bf16.msra.mxu0 %v906
    %982 = vmatprep.subr.bf16.mxu0 0
    %983 = vmatpush1.bf16.msra.mxu0 %v907
    %984 = vmatprep.subr.bf16.mxu0 0
    %985 = vmatpush1.bf16.msra.mxu0 %v908
    %986 = vmatprep.subr.bf16.mxu0 0
    %987 = vmatpush1.bf16.msra.mxu0 %v909
    %988 = vmatprep.subr.bf16.mxu0 0
    %989 = vmatpush1.bf16.msra.mxu0 %v910
    %990 = vmatprep.subr.bf16.mxu0 0
    %991 = vmatpush1.bf16.msra.mxu0 %v911
    %992 = vmatprep.mubr.bf16.mxu0 %v697
    %993 = vmatmul.mubr.bf16.gmra.mrb[0].mxu0 %v696
    %v994 = vpop.f32.mrb[0].mxu0
    %v995 = vadd.f32 %v767, %v994
    %v996 = vpop.f32.mrb[0].mxu0
    %v997 = vpop.f32.mrb[0].mxu0
    %v998 = vpop.f32.mrb[0].mxu0
    %999 = vdwg.mxu0
    %1000 = vmatprep.subr.bf16.mxu0 0
    %1001 = vmatpush1.bf16.msra.mxu0 %v912
    %1002 = vmatprep.subr.bf16.mxu0 0
    %1003 = vmatpush1.bf16.msra.mxu0 %v913
    %1004 = vmatprep.subr.bf16.mxu0 0
    %1005 = vmatpush1.bf16.msra.mxu0 %v914
    %1006 = vmatprep.subr.bf16.mxu0 0
    %1007 = vmatpush1.bf16.msra.mxu0 %v915
    %1008 = vmatprep.subr.bf16.mxu0 0
    %1009 = vmatpush1.bf16.msra.mxu0 %v916
    %1010 = vmatprep.subr.bf16.mxu0 0
    %1011 = vmatpush1.bf16.msra.mxu0 %v917
    %1012 = vmatprep.subr.bf16.mxu0 0
    %1013 = vmatpush1.bf16.msra.mxu0 %v918
    %1014 = vmatprep.subr.bf16.mxu0 0
    %1015 = vmatpush1.bf16.msra.mxu0 %v919
    %1016 = vmatprep.subr.bf16.mxu0 0
    %1017 = vmatpush1.bf16.msra.mxu0 %v920
    %1018 = vmatprep.subr.bf16.mxu0 0
    %1019 = vmatpush1.bf16.msra.mxu0 %v921
    %1020 = vmatprep.subr.bf16.mxu0 0
    %1021 = vmatpush1.bf16.msra.mxu0 %v922
    %1022 = vmatprep.subr.bf16.mxu0 0
    %1023 = vmatpush1.bf16.msra.mxu0 %v923
    %1024 = vmatprep.subr.bf16.mxu0 0
    %1025 = vmatpush1.bf16.msra.mxu0 %v924
    %1026 = vmatprep.subr.bf16.mxu0 0
    %1027 = vmatpush1.bf16.msra.mxu0 %v925
    %1028 = vmatprep.subr.bf16.mxu0 0
    %1029 = vmatpush1.bf16.msra.mxu0 %v926
    %1030 = vmatprep.subr.bf16.mxu0 0
    %1031 = vmatpush1.bf16.msra.mxu0 %v927
    %1032 = vmatprep.mubr.bf16.mxu0 %v699
    %1033 = vmatmul.mubr.bf16.gmra.mrb[0].mxu0 %v698
    %v1034 = vpop.f32.mrb[0].mxu0
    %v1035 = vadd.f32 %v995, %v1034
    %v1036 = vpop.f32.mrb[0].mxu0
    %v1037 = vpop.f32.mrb[0].mxu0
    %v1038 = vpop.f32.mrb[0].mxu0
    %1039 = vdwg.mxu0
    %v1040 = vmax.f32 %v1035, 0.0
    %v1041 = vand.u32 2147483647, %v1035
    %v1042 = vsub.f32 0.0, %v1041
    %v1043 = vmul.f32 %v1042, 1.442695
    %v1044 = vpow.pop %v1043
    %v1045 = vadd.f32 %v1044, 1.0
    %v1046 = vlog2.pop %v1045
    %v1047 = vmul.f32 %v1046, 0.6931472
    %v1048 = vmul.f32 -0.5, %v1044
    %v1049 = vadd.f32 %v1048, 1.0
    %v1050 = vmul.f32 %v1049, %v1044
    %v1051 = vand.u32 2147483647, %v1044
    %vm1052 = vcmp.lt.f32.partialorder %v1051, 0.0004427343
    %v1053 = vsel %vm1052, %v1050, %v1047
    %v1054 = vadd.f32 %v1040, %v1053
    %v1055 = vld [vmem:[%s1] sm:$0xff]
    %1057 = vrot.lane.b32.xlu0 %v1055, 32
    %v1058 = vpop.permute.xlu0 %1057
    %v1060 = vmul.f32 %v1054, %v1058
    %1062 = vrot.lane.b32.xlu0 %v1060, 96
    %v1063 = vpop.permute.xlu0 %1062
    %v1065 = vadd.f32 %v1035, %v1063
    %1067 = vrot.lane.b32.xlu0 %v159, 32
    %v1068 = vpop.permute.xlu0 %1067
    %vm1070 = vcmask 261120
    %v1071 = vsel %vm1070, %v1065, %v1068
    %v1072 = vpack.c.bf16 %v1071, %v1071
    %v1073 = vld [vmem:[%s5] sm:$0xff]
    %v1074 = vld [vmem:[%s5 + $0x8] sm:$0xff]
    %v1075 = vld [vmem:[%s5 + $0x10] sm:$0xff]
    %v1076 = vld [vmem:[%s5 + $0x18] sm:$0xff]
    %v1077 = vld [vmem:[%s5 + $0x20] sm:$0xff]
    %v1078 = vld [vmem:[%s5 + $0x28] sm:$0xff]
    %v1079 = vlaneseq
    %v1080 = vshrl.u32 %v1079, 7
    %v1081 = vsub.s32 3, %v1080
    %v1082 = vrot.slane %v44, %v1081
    %v1083 = vlaneseq
    %v1084 = vshrl.u32 %v1083, 7
    %v1085 = vsub.s32 7, %v1084
    %v1086 = vrot.slane %v44, %v1085
    %v1089 = vlaneseq
    %v1090 = vshrl.u32 %v1089, 7
    %v1091 = vsub.s32 3, %v1090
    %v1092 = vrot.slane %v1082, %v1091
    %v1093 = vlaneseq
    %v1094 = vshrl.u32 %v1093, 7
    %v1095 = vsub.s32 3, %v1094
    %v1096 = vrot.slane %v1086, %v1095
    %v1103 = vunpack.c.l.b16 %v1073
    %v1104 = vunpack.c.h.b16 %v1073
    %v1105 = vunpack.c.l.b16 %v1074
    %v1106 = vunpack.c.h.b16 %v1074
    %v1107 = vunpack.c.l.b16 %v1075
    %v1108 = vunpack.c.h.b16 %v1075
    %v1109 = vunpack.c.l.b16 %v1076
    %v1110 = vunpack.c.h.b16 %v1076
    %v1111 = vunpack.c.l.b16 %v1077
    %v1112 = vunpack.c.h.b16 %v1077
    %v1113 = vunpack.c.l.b16 %v1078
    %v1114 = vunpack.c.h.b16 %v1078
    %v1115 = vpack.c.b16 %v1105, %v1103
    %v1116 = vpack.c.b16 %v1106, %v1104
    %v1117 = vpack.c.b16 %v1109, %v1107
    %v1118 = vpack.c.b16 %v1110, %v1108
    %v1119 = vpack.c.b16 %v1113, %v1111
    %v1120 = vpack.c.b16 %v1114, %v1112
    %vm1127 = vcmask 392192
    %v1129 = vsel %vm1127, %v1072, 0
    %1131 = vmatprep.subr.bf16.mxu0 %v1116
    %1132 = vmatpush1.bf16.msra.mxu0 %v1115
    %1133 = vmatprep.subr.bf16.mxu0 %v1118
    %1134 = vmatpush1.bf16.msra.mxu0 %v1117
    %1135 = vmatprep.subr.bf16.mxu0 %v1120
    %1136 = vmatpush1.bf16.msra.mxu0 %v1119
    %1137 = vmatprep.subr.bf16.mxu0 0
    %1138 = vmatpush1.bf16.msra.mxu0 0
    %1139 = vmatprep.subr.bf16.mxu0 0
    %1140 = vmatpush1.bf16.msra.mxu0 0
    %1141 = vmatprep.subr.bf16.mxu0 0
    %1142 = vmatpush1.bf16.msra.mxu0 0
    %1143 = vmatprep.subr.bf16.mxu0 0
    %1144 = vmatpush1.bf16.msra.mxu0 0
    %1145 = vmatprep.subr.bf16.mxu0 0
    %1146 = vmatpush1.bf16.msra.mxu0 0
    %1147 = vmatprep.subr.bf16.mxu0 0
    %1148 = vmatpush1.bf16.msra.mxu0 0
    %1149 = vmatprep.subr.bf16.mxu0 0
    %1150 = vmatpush1.bf16.msra.mxu0 0
    %1151 = vmatprep.subr.bf16.mxu0 0
    %1152 = vmatpush1.bf16.msra.mxu0 0
    %1153 = vmatprep.subr.bf16.mxu0 0
    %1154 = vmatpush1.bf16.msra.mxu0 0
    %1155 = vmatprep.subr.bf16.mxu0 0
    %1156 = vmatpush1.bf16.msra.mxu0 0
    %1157 = vmatprep.subr.bf16.mxu0 0
    %1158 = vmatpush1.bf16.msra.mxu0 0
    %1159 = vmatprep.subr.bf16.mxu0 0
    %1160 = vmatpush1.bf16.msra.mxu0 0
    %1161 = vmatprep.subr.bf16.mxu0 0
    %1162 = vmatpush1.bf16.msra.mxu0 0
    %1163 = vmatprep.mubr.bf16.mxu0 0
    %1164 = vmatmul.mubr.bf16.gmra.mrb[0].mxu0 %v1129
    %v1165 = vpop.f32.mrb[0].mxu0
    %v1166 = vadd.f32 %v1092, %v1165
    %v1167 = vpop.f32.mrb[0].mxu0
    %v1168 = vadd.f32 %v1096, %v1167
    %v1169 = vpop.f32.mrb[0].mxu0
    %v1170 = vpop.f32.mrb[0].mxu0
    %1171 = vdwg.mxu0
    %v1172 = vtanh.pop %v1166
    %v1173 = vtanh.pop %v1168
    %v1174 = vld [vmem:[%s7] sm:$0xff]
    %v1175 = vlaneseq
    %v1176 = vshrl.u32 %v1175, 7
    %v1177 = vsub.s32 3, %v1176
    %v1178 = vrot.slane %v1174, %v1177
    %vm1179 = vcmask 523264
    %v1180 = vsel %vm1179, %v1172, 0.0
    %1181 = vadd.xlane.f32.xlu0 %v1180
    %v1182 = vpop.xlane.xlu0 %1181
    %v1183 = vrcp.pop 64.0
    %v1184 = vmul.f32 %v1182, %v1183
    %v1185 = vlaneseq
    %v1186 = vshrl.u32 %v1185, 7
    %v1187 = vsub.s32 0, %v1186
    %v1188 = vrot.slane %v1174, %v1187
    %v1189 = vmul.f32 %v1184, %v1188
    %v1190 = vadd.f32 %v1178, %v1189
    %1192 = vrot.lane.b32.xlu0 %v1172, 64
    %v1193 = vpop.permute.xlu0 %1192
    %v1195 = vsel %vm1179, %v1193, 0.0
    %1196 = vadd.xlane.f32.xlu0 %v1195
    %v1197 = vpop.xlane.xlu0 %1196
    %v1198 = vmul.f32 %v1197, %v1183
    %v1199 = vlaneseq
    %v1200 = vshrl.u32 %v1199, 7
    %v1201 = vsub.s32 1, %v1200
    %v1202 = vrot.slane %v1174, %v1201
    %v1203 = vmul.f32 %v1198, %v1202
    %v1204 = vadd.f32 %v1190, %v1203
    %v1205 = vsel %vm1179, %v1173, 0.0
    %1206 = vadd.xlane.f32.xlu0 %v1205
    %v1207 = vpop.xlane.xlu0 %1206
    %v1208 = vmul.f32 %v1207, %v1183
    %v1209 = vlaneseq
    %v1210 = vshrl.u32 %v1209, 7
    %v1211 = vsub.s32 2, %v1210
    %v1212 = vrot.slane %v1174, %v1211
    %v1213 = vmul.f32 %v1208, %v1212
    %v1214 = vadd.f32 %v1204, %v1213
    %1215 = vst [vmem:[%s8] sm:$0xff] %v1214
    // Predicated region
    $region38: #{conditional_biggan_forward.1} parent=1 // pred_check
      _
    $region39: #{conditional_biggan_forward.1} parent=1 // pred_check_branch
      %1217 = sbr.rel (0) target = $region41
    $region40: #{conditional_biggan_forward.1} parent=1 // pred_region
      _
    $region41: #{conditional_biggan_forward.1} parent=1 // pred_fallthru
      _
    // Predicated region
    $region42: #{conditional_biggan_forward.1} parent=1 // pred_check
      _
    $region43: #{conditional_biggan_forward.1} parent=1 // pred_check_branch
      %1219 = sbr.rel (0) target = $region45
    $region44: #{conditional_biggan_forward.1} parent=1 // pred_region
      _
    $region45: #{conditional_biggan_forward.1} parent=1 // pred_fallthru
      _
    %1220 = vsyncpa [#allocation3], 1

</llo_original>
